<compile_context>
chip_gen: v7x
topology: tpu7x:2x2x1
jax: 0.10.0
libtpu: 0.0.40
codegen_flags: <defaults>
</compile_context>

<pallas_src>
import functools

import jax
import jax.numpy as jnp
from jax.experimental import pallas as pl
from jax.experimental.pallas import tpu as pltpu

_LANE = 1024           # lane-dense column width (multiple of 128)
_MAX_TILE_ROWS = 512   # 512 x 1024 f32 tile = 2 MiB/buffer; 8 MiB total with
                       # in+out double-buffering -> fits v7x's 32 MiB scoped VMEM


def _react_pkn_kernel(params_ref, x_ref, o_ref, *, dp: int):
    """out = ap * x**dp + bp * x + cp, elementwise on a (tile_rows, 1024) block.

    params_ref : SMEM ref, shape (3,)  -> [ap, bp, cp] (float32)
    x_ref      : VMEM ref, (tile_rows, _LANE)
    o_ref      : VMEM ref, same shape as x_ref
    """
    ap = params_ref[0]
    bp = params_ref[1]
    cp = params_ref[2]
    x = x_ref[...]
    if dp == 2:
        # Horner form: (ap*x + bp)*x + cp  -> 2 mul + 2 add per element.
        out = (ap * x + bp) * x + cp
    else:
        # General static integer power (dp is a Python int).
        out = ap * (x ** dp) + bp * x + cp
    # Params are f32, so the RHS may promote; cast back to the output dtype.
    o_ref[...] = out.astype(o_ref.dtype)


def _round_up(n: int, m: int) -> int:
    return ((n + m - 1) // m) * m


def react_pkn_forward(x, ap, bp, cp, dp=2, dropout=False):
    """JAX wrapper mimicking ReactPKN.forward (inference path)."""
    # TODO(synk): dropout branch (torch.nn.Dropout()) not implemented; the
    # module defaults to dropout=False and training-mode RNG semantics are
    # out of scope for this kernel.
    assert not dropout, "dropout path not implemented"

    orig_shape = x.shape
    orig_dtype = x.dtype
    total = x.size

    # --- lane-dense slab layout (wrapper-side plumbing only) ---------------
    padded_total = _round_up(total, _LANE)
    rows = padded_total // _LANE
    tile_rows = min(_MAX_TILE_ROWS, _round_up(rows, 8))
    rows_padded = _round_up(rows, tile_rows)
    padded_total = rows_padded * _LANE

    x_flat = x.reshape(-1)
    if padded_total != total:
        x_flat = jnp.pad(x_flat, (0, padded_total - total))
    x2d = x_flat.reshape(rows_padded, _LANE)

    params = jnp.array([ap, bp, cp], dtype=jnp.float32)

    grid = (rows_padded // tile_rows,)

    out2d = pl.pallas_call(
        functools.partial(_react_pkn_kernel, dp=dp),
        out_shape=jax.ShapeDtypeStruct((rows_padded, _LANE), orig_dtype),
        grid=grid,
        in_specs=[
            pl.BlockSpec(memory_space=pltpu.SMEM),              # scalar params
            pl.BlockSpec((tile_rows, _LANE), lambda i: (i, 0)),  # input tile
        ],
        out_specs=pl.BlockSpec((tile_rows, _LANE), lambda i: (i, 0)),
        compiler_params=pltpu.CompilerParams(
            dimension_semantics=("parallel",),  # megacore sharding on v7x
        ),
    )(params, x2d)

    # Strip the padded tail and restore the original NCHW shape.
    return out2d.reshape(-1)[:total].reshape(orig_shape)


if __name__ == "__main__":
    # Deterministic "parameters" matching the module's __init__ defaults.
    ap, bp, cp, dp = 0.009, 0.5, 0.47, 2

    key = jax.random.PRNGKey(0)
    x = jax.random.normal(key, (2, 4, 16, 16), dtype=jnp.float32)  # NCHW

    out = react_pkn_forward(x, ap, bp, cp, dp=dp, dropout=False)
    out = jax.block_until_ready(out)

    # Sanity check against a pure-JAX reference of the PyTorch forward.
    ref = ap * x ** dp + bp * x + cp
    assert out.shape == x.shape and out.dtype == x.dtype
    assert jnp.allclose(out, ref, atol=1e-5, rtol=1e-5)

    print("KERNEL_OK")
</pallas_src>

<mosaic_0001>
module attributes {stable_mosaic.version = 11 : i64} {
  func.func @_react_pkn_kernel(%arg0: i32, %arg1: memref<3xf32, #tpu.memory_space<smem>>, %arg2: memref<8x1024xf32, #tpu.memory_space<vmem>>, %arg3: memref<8x1024xf32, #tpu.memory_space<vmem>>) attributes {dimension_semantics = [#tpu.dimension_semantics<parallel>], iteration_bounds = array<i64: 1>, scalar_prefetch = 0 : i64, scratch_operands = 0 : i64, tpu.core_type = #tpu.core_type<tc>, window_params = [{transform_indices = @transform_0, window_bounds = array<i64: 3>}, {transform_indices = @transform_1, window_bounds = array<i64: 8, 1024>}, {transform_indices = @transform_2, window_bounds = array<i64: 8, 1024>}]} {
    %c0 = arith.constant 0 : index
    %0 = memref.load %arg1[%c0] : memref<3xf32, #tpu.memory_space<smem>>
    %c1 = arith.constant 1 : index
    %1 = memref.load %arg1[%c1] : memref<3xf32, #tpu.memory_space<smem>>
    %c2 = arith.constant 2 : index
    %2 = memref.load %arg1[%c2] : memref<3xf32, #tpu.memory_space<smem>>
    %c0_0 = arith.constant 0 : index
    %c0_1 = arith.constant 0 : index
    %3 = vector.load %arg2[%c0_0, %c0_1] : memref<8x1024xf32, #tpu.memory_space<vmem>>, vector<8x1024xf32>
    %4 = vector.broadcast %0 : f32 to vector<8x1024xf32>
    %5 = arith.mulf %4, %3 : vector<8x1024xf32>
    %6 = vector.broadcast %1 : f32 to vector<8x1024xf32>
    %7 = arith.addf %5, %6 : vector<8x1024xf32>
    %8 = arith.mulf %7, %3 : vector<8x1024xf32>
    %9 = vector.broadcast %2 : f32 to vector<8x1024xf32>
    %10 = arith.addf %8, %9 : vector<8x1024xf32>
    %c0_2 = arith.constant 0 : index
    %c0_3 = arith.constant 0 : index
    %11 = vector.load %arg3[%c0_2, %c0_3] : memref<8x1024xf32, #tpu.memory_space<vmem>>, vector<8x1024xf32>
    tpu.vector_store %arg3[%c0_2, %c0_3], %10 {strides = array<i32>} : memref<8x1024xf32, #tpu.memory_space<vmem>>, vector<8x1024xf32>,
    return
  }
  func.func @transform_0(%arg0: i32) -> i32 {
    %c0_i32 = arith.constant 0 : i32
    %c0_i32_0 = arith.constant 0 : i32
    return %c0_i32 : i32
  }
  func.func @transform_1(%arg0: i32) -> (i32, i32) {
    %c0_i32 = arith.constant 0 : i32
    %c0_i32_0 = arith.constant 0 : i32
    return %arg0, %c0_i32 : i32, i32
  }
  func.func @transform_2(%arg0: i32) -> (i32, i32) {
    %c0_i32 = arith.constant 0 : i32
    %c0_i32_0 = arith.constant 0 : i32
    return %arg0, %c0_i32 : i32, i32
  }
}

</mosaic_0001>

<llo_original>
// kernel: tpu_custom_call.1
$region0: #{tpu_custom_call.1}
  #allocation0 [shape = 'u32[]', space=smem, size = 0x4, offset = 0x4, fixed_abs, tag = 'smem constant byte address 0x4 - core index']
  #allocation1 [shape = 'u32[144,128]{1,0:T(1,128)}', space=vmem, size = 0x12000, scoped, tag = 'internal scratch']
  %s0 = inlined_call_operand.hbm [shape: f32[3], index: 0, kind: input, shape index: {}]
  %s1 = inlined_call_operand.hbm [shape: f32[8,1024], index: 1, kind: input, shape index: {}]
  %s2 = inlined_call_operand.hbm [shape: f32[8,1024], index: 2, kind: output, shape index: {}]
  %s3 = sld [smem:[#allocation0]]
  $region26: #{tpu_custom_call.1} parent=0
    _
  %s5 = ssub.s32 1, %s3
  %s6 = scalar_select 0, %s5, %s3
  $region1: #{tpu_custom_call.1} parent=0
    #allocation2 [shape = 'u8[512]{0}', space=smem, size = 0x200, scoped, tag = 'input window, operand 0, single buffered']
    #allocation3 [shape = 's32[1]{0}', space=sflag, size = 0x4, scoped, tag = 'scoped memory for tpu_custom_call.1']
    #allocation4 [shape = 's32[1]{0}', space=sflag, size = 0x4, scoped, tag = 'scoped memory for tpu_custom_call.1']
    #allocation5 [shape = 's32[1]{0}', space=sflag, size = 0x4, scoped, tag = 'scoped memory for tpu_custom_call.1']
    #allocation6 [shape = 'u8[32768]{0}', space=vmem, size = 0x8000, scoped, tag = 'input window, operand 1, single buffered']
    #allocation7 [shape = 'u8[32768]{0}', space=vmem, size = 0x8000, scoped, tag = 'output window, operand 0, single buffered']
    %7 = vsyncpa [#allocation5], 0
    %8 = vsyncpa [#allocation3], 0
    %9 = vsyncpa [#allocation4], 0
    // Predicated region
    $region2: #{tpu_custom_call.1} parent=1 // pred_check
      _
    $region3: #{tpu_custom_call.1} parent=1 // pred_check_branch
      %11 = sbr.rel (0) target = $region5
    $region4: #{tpu_custom_call.1} parent=1 // pred_region
      %s13 = ssub.s32 16, 16
      %14 = vsyncadd [#allocation5], %s13
      %17 = dma.hbm_to_smem %s0, 16, [#allocation2], [#allocation5]
    $region5: #{tpu_custom_call.1} parent=1 // pred_fallthru
      _
    // Predicated region
    $region6: #{tpu_custom_call.1} parent=1 // pred_check
      _
    $region7: #{tpu_custom_call.1} parent=1 // pred_check_branch
      %19 = sbr.rel (0) target = $region9
    $region8: #{tpu_custom_call.1} parent=1 // pred_region
      %s21 = ssub.s32 1024, 1024
      %22 = vsyncadd [#allocation3], %s21
      %s24 = sshll.u32 [#allocation6], 4
      %s25 = int_to_ptr.vmem [resolvable:$true] %s24
      %27 = dma.hbm_to_vmem [thread:$0]  %s1, 1024, %s25, [#allocation3]
    $region9: #{tpu_custom_call.1} parent=1 // pred_fallthru
      _
    // Predicated region
    $region10: #{tpu_custom_call.1} parent=1 // pred_check
      _
    $region11: #{tpu_custom_call.1} parent=1 // pred_check_branch
      %29 = sbr.rel (0) target = $region13
    $region12: #{tpu_custom_call.1} parent=1 // pred_region
      %30 = dma.done [#allocation5], 16
    $region13: #{tpu_custom_call.1} parent=1 // pred_fallthru
      _
    // Predicated region
    $region14: #{tpu_custom_call.1} parent=1 // pred_check
      _
    $region15: #{tpu_custom_call.1} parent=1 // pred_check_branch
      %32 = sbr.rel (0) target = $region17
    $region16: #{tpu_custom_call.1} parent=1 // pred_region
      %33 = dma.done [#allocation3], 1024
    $region17: #{tpu_custom_call.1} parent=1 // pred_fallthru
      _
    %34 = sfence
    %s35 = sld [smem:[#allocation2]]
    %s36 = sld [smem:[#allocation2 + $0x1]]
    %s37 = sld [smem:[#allocation2 + $0x2]]
    %v38 = vld [vmem:[#allocation6] sm:$0xff]
    %v39 = vld [vmem:[#allocation6 + $0x8] sm:$0xff]
    %v40 = vld [vmem:[#allocation6 + $0x10] sm:$0xff]
    %v41 = vld [vmem:[#allocation6 + $0x18] sm:$0xff]
    %v42 = vld [vmem:[#allocation6 + $0x20] sm:$0xff]
    %v43 = vld [vmem:[#allocation6 + $0x28] sm:$0xff]
    %v44 = vld [vmem:[#allocation6 + $0x30] sm:$0xff]
    %v45 = vld [vmem:[#allocation6 + $0x38] sm:$0xff]
    %v46 = vstv %s35
    %v47 = vmul.f32 %v46, %v38
    %v48 = vmul.f32 %v46, %v39
    %v49 = vmul.f32 %v46, %v40
    %v50 = vmul.f32 %v46, %v41
    %v51 = vmul.f32 %v46, %v42
    %v52 = vmul.f32 %v46, %v43
    %v53 = vmul.f32 %v46, %v44
    %v54 = vmul.f32 %v46, %v45
    %v55 = vstv %s36
    %v56 = vadd.f32 %v47, %v55
    %v57 = vadd.f32 %v48, %v55
    %v58 = vadd.f32 %v49, %v55
    %v59 = vadd.f32 %v50, %v55
    %v60 = vadd.f32 %v51, %v55
    %v61 = vadd.f32 %v52, %v55
    %v62 = vadd.f32 %v53, %v55
    %v63 = vadd.f32 %v54, %v55
    %v64 = vmul.f32 %v56, %v38
    %v65 = vmul.f32 %v57, %v39
    %v66 = vmul.f32 %v58, %v40
    %v67 = vmul.f32 %v59, %v41
    %v68 = vmul.f32 %v60, %v42
    %v69 = vmul.f32 %v61, %v43
    %v70 = vmul.f32 %v62, %v44
    %v71 = vmul.f32 %v63, %v45
    %v72 = vstv %s37
    %v73 = vadd.f32 %v64, %v72
    %v74 = vadd.f32 %v65, %v72
    %v75 = vadd.f32 %v66, %v72
    %v76 = vadd.f32 %v67, %v72
    %v77 = vadd.f32 %v68, %v72
    %v78 = vadd.f32 %v69, %v72
    %v79 = vadd.f32 %v70, %v72
    %v80 = vadd.f32 %v71, %v72
    %81 = vst [vmem:[#allocation7] sm:$0xff] %v73
    %82 = vst [vmem:[#allocation7 + $0x8] sm:$0xff] %v74
    %83 = vst [vmem:[#allocation7 + $0x10] sm:$0xff] %v75
    %84 = vst [vmem:[#allocation7 + $0x18] sm:$0xff] %v76
    %85 = vst [vmem:[#allocation7 + $0x20] sm:$0xff] %v77
    %86 = vst [vmem:[#allocation7 + $0x28] sm:$0xff] %v78
    %87 = vst [vmem:[#allocation7 + $0x30] sm:$0xff] %v79
    %88 = vst [vmem:[#allocation7 + $0x38] sm:$0xff] %v80
    // Predicated region
    $region18: #{tpu_custom_call.1} parent=1 // pred_check
      _
    $region19: #{tpu_custom_call.1} parent=1 // pred_check_branch
      %90 = sbr.rel (0) target = $region21
    $region20: #{tpu_custom_call.1} parent=1 // pred_region
      %s92 = ssub.s32 1024, 1024
      %93 = vsyncadd [#allocation4], %s92
      %s95 = sshll.u32 [#allocation7], 4
      %s96 = int_to_ptr.vmem [resolvable:$true] %s95
      %98 = dma.vmem_to_hbm [thread:$0]  %s96, 1024, %s2, [#allocation4]
    $region21: #{tpu_custom_call.1} parent=1 // pred_fallthru
      _
    // Predicated region
    $region22: #{tpu_custom_call.1} parent=1 // pred_check
      _
    $region23: #{tpu_custom_call.1} parent=1 // pred_check_branch
      %100 = sbr.rel (0) target = $region25
    $region24: #{tpu_custom_call.1} parent=1 // pred_region
      %101 = dma.done [#allocation4], 1024
    $region25: #{tpu_custom_call.1} parent=1 // pred_fallthru
      _
    %102 = vsyncpa [#allocation3], 1
    %103 = vsyncpa [#allocation4], 1
    %104 = vsyncpa [#allocation5], 1

</llo_original>
